<compile_context>
chip_gen: v5e
topology: v5e:2x2
jax: 0.10.0
libtpu: 0.0.40
codegen_flags: <defaults>
</compile_context>

<pallas_src>
import jax
import jax.numpy as jnp
from jax.experimental import pallas as pl
from jax.experimental.pallas import tpu as pltpu


def _se_kernel(x_ref, w1_ref, b1_ref, w2_ref, b2_ref, o_ref):
    # x_ref block: (Bt, C, HW)  -- channels on sublanes, spatial on lanes.
    x = x_ref[...]                                            # input dtype
    hw = x.shape[-1]

    # --- squeeze: f32 spatial mean per (image, channel) (lane reduce) ---
    mean = jnp.sum(x.astype(jnp.float32), axis=-1, keepdims=True) * (1.0 / hw)
    # mean: (Bt, C, 1)

    # --- excite: fc1 (C -> hidden) + SiLU, on VPU/XLU (mul + reduce) ---
    w1 = w1_ref[...].astype(jnp.float32)[None]                # (1, C, hidden)
    b1 = b1_ref[...].astype(jnp.float32)[None]                # (1, 1, hidden)
    h = jnp.sum(w1 * mean, axis=1, keepdims=True) + b1        # (Bt, 1, hidden)
    h = h * jax.nn.sigmoid(h)                                 # SiLU

    # --- fc2 (hidden -> C) + Sigmoid ---
    w2 = w2_ref[...].astype(jnp.float32)[None]                # (1, C, hidden)
    b2 = b2_ref[...].astype(jnp.float32)[None]                # (1, C, 1)
    s = jnp.sum(w2 * h, axis=-1, keepdims=True) + b2          # (Bt, C, 1)
    s = jax.nn.sigmoid(s)

    # --- scale: broadcast gate over the lane (HW) axis, in input dtype ---
    o_ref[...] = (x * s.astype(x.dtype)).astype(o_ref.dtype)


def _pick_batch_tile(n, per_image_bytes, target_bytes=1 << 20):
    """Largest divisor of n whose packed block stays around `target_bytes`."""
    bt = max(1, min(n, target_bytes // max(per_image_bytes, 1)))
    while n % bt:
        bt -= 1
    return bt


def se_unit_pallas(x_nchw, w1, b1, w2, b2):
    """SEUnit forward.

    x_nchw : (N, C, H, W)
    w1     : (hidden, C)  -- fc1 Conv2d(C, hidden, 1x1) weight, squeezed
    b1     : (hidden,)    -- fc1 bias
    w2     : (C, hidden)  -- fc2 Conv2d(hidden, C, 1x1) weight, squeezed
    b2     : (C,)         -- fc2 bias
    Returns (N, C, H, W).
    """
    N, C, H, W = x_nchw.shape
    HW = H * W
    hidden = w1.shape[0]

    # Free reshape: keep the NCHW layout, HW on the lane axis.
    x = x_nchw.reshape(N, C, HW)

    # Tiny one-time weight re-layouts (negligible vs. the x traffic).
    w1_k = jnp.transpose(w1)          # (C, hidden)
    b1_k = b1.reshape(1, hidden)      # (1, hidden)
    w2_k = w2                         # (C, hidden)
    b2_k = b2.reshape(C, 1)           # (C, 1)

    per_image_bytes = C * HW * x.dtype.itemsize
    Bt = _pick_batch_tile(N, per_image_bytes)
    block_bytes = Bt * per_image_bytes
    grid = (N // Bt,)

    cp_kwargs = dict(dimension_semantics=("parallel",))
    # Input + output blocks are both double-buffered (~4x block bytes).  Only
    # raise the scoped VMEM limit when the default (16 MiB on v5e) is at risk,
    # and stay well under v7x's 64 MiB physical VMEM.
    if 4 * block_bytes > (16 << 20):
        cp_kwargs["vmem_limit_bytes"] = int(min(4 * block_bytes + (4 << 20),
                                                48 << 20))

    out = pl.pallas_call(
        _se_kernel,
        out_shape=jax.ShapeDtypeStruct((N, C, HW), x_nchw.dtype),
        grid_spec=pltpu.PrefetchScalarGridSpec(
            num_scalar_prefetch=0,
            grid=grid,
            in_specs=[
                pl.BlockSpec((Bt, C, HW), lambda g: (g, 0, 0)),   # x
                pl.BlockSpec((C, hidden), lambda g: (0, 0)),      # w1 (C,hid)
                pl.BlockSpec((1, hidden), lambda g: (0, 0)),      # b1
                pl.BlockSpec((C, hidden), lambda g: (0, 0)),      # w2 (C,hid)
                pl.BlockSpec((C, 1), lambda g: (0, 0)),           # b2
            ],
            out_specs=pl.BlockSpec((Bt, C, HW), lambda g: (g, 0, 0)),
        ),
        compiler_params=pltpu.CompilerParams(**cp_kwargs),
    )(x, w1_k, b1_k, w2_k, b2_k)

    # Free reshape back to NCHW.
    return out.reshape(N, C, H, W)


def se_unit_ref(x, w1, b1, w2, b2):
    """Pure-JAX reference matching the PyTorch module semantics."""
    xf = x.astype(jnp.float32)
    mean = jnp.mean(xf, axis=(2, 3))                      # (N, C)
    h = mean @ w1.T + b1                                  # (N, hidden)
    h = h * jax.nn.sigmoid(h)                             # SiLU
    s = jax.nn.sigmoid(h @ w2.T + b2)                     # (N, C)
    return (xf * s[:, :, None, None]).astype(x.dtype)


if __name__ == "__main__":
    # Small shapes consistent with the module: in_channel=8, reduction_ratio=4
    N, C, H, W = 2, 8, 16, 16
    hidden = C // 4

    key = jax.random.PRNGKey(0)
    kx, k1, kb1, k2, kb2 = jax.random.split(key, 5)

    x = jax.random.normal(kx, (N, C, H, W), dtype=jnp.float32)
    # fc1: Conv2d(C, hidden, 1x1) -> weight (hidden, C, 1, 1) squeezed to (hidden, C)
    w1 = jax.random.normal(k1, (hidden, C), dtype=jnp.float32) * 0.1
    b1 = jax.random.normal(kb1, (hidden,), dtype=jnp.float32) * 0.1
    # fc2: Conv2d(hidden, C, 1x1) -> weight (C, hidden, 1, 1) squeezed to (C, hidden)
    w2 = jax.random.normal(k2, (C, hidden), dtype=jnp.float32) * 0.1
    b2 = jax.random.normal(kb2, (C,), dtype=jnp.float32) * 0.1

    out = se_unit_pallas(x, w1, b1, w2, b2)
    out = jax.block_until_ready(out)

    ref = se_unit_ref(x, w1, b1, w2, b2)
    assert out.shape == (N, C, H, W)
    assert jnp.allclose(out, ref, atol=1e-5, rtol=1e-5), "mismatch vs reference"

    print("KERNEL_OK")
</pallas_src>

<mosaic_0001>
module attributes {stable_mosaic.version = 11 : i64} {
  func.func @_se_kernel(%arg0: i32, %arg1: memref<2x8x256xf32, #tpu.memory_space<vmem>>, %arg2: memref<8x2xf32, #tpu.memory_space<vmem>>, %arg3: memref<1x2xf32, #tpu.memory_space<vmem>>, %arg4: memref<8x2xf32, #tpu.memory_space<vmem>>, %arg5: memref<8x1xf32, #tpu.memory_space<vmem>>, %arg6: memref<2x8x256xf32, #tpu.memory_space<vmem>>) attributes {dimension_semantics = [#tpu.dimension_semantics<parallel>], iteration_bounds = array<i64: 1>, scalar_prefetch = 0 : i64, scratch_operands = 0 : i64, tpu.core_type = #tpu.core_type<tc>, window_params = [{transform_indices = @transform_0, window_bounds = array<i64: 2, 8, 256>}, {pipeline_mode = #tpu.pipeline_mode<synchronous>, transform_indices = @transform_1, window_bounds = array<i64: 8, 2>}, {pipeline_mode = #tpu.pipeline_mode<synchronous>, transform_indices = @transform_2, window_bounds = array<i64: 1, 2>}, {pipeline_mode = #tpu.pipeline_mode<synchronous>, transform_indices = @transform_3, window_bounds = array<i64: 8, 2>}, {pipeline_mode = #tpu.pipeline_mode<synchronous>, transform_indices = @transform_4, window_bounds = array<i64: 8, 1>}, {transform_indices = @transform_5, window_bounds = array<i64: 2, 8, 256>}]} {
    %c0 = arith.constant 0 : index
    %c0_0 = arith.constant 0 : index
    %c0_1 = arith.constant 0 : index
    %0 = vector.load %arg1[%c0, %c0_0, %c0_1] : memref<2x8x256xf32, #tpu.memory_space<vmem>>, vector<2x8x256xf32>
    %cst = arith.constant dense<0.000000e+00> : vector<2x8xf32>
    %1 = vector.multi_reduction <add>, %0, %cst [2] : vector<2x8x256xf32> to vector<2x8xf32>
    %2 = vector.shape_cast %1 : vector<2x8xf32> to vector<2x8x1xf32>
    %cst_2 = arith.constant 3.906250e-03 : f32
    %3 = vector.broadcast %cst_2 : f32 to vector<2x8x1xf32>
    %4 = arith.mulf %2, %3 : vector<2x8x1xf32>
    %c0_3 = arith.constant 0 : index
    %c0_4 = arith.constant 0 : index
    %5 = vector.load %arg2[%c0_3, %c0_4] : memref<8x2xf32, #tpu.memory_space<vmem>>, vector<8x2xf32>
    %6 = vector.shape_cast %5 : vector<8x2xf32> to vector<1x8x2xf32>
    %c0_5 = arith.constant 0 : index
    %c0_6 = arith.constant 0 : index
    %7 = vector.load %arg3[%c0_5, %c0_6] : memref<1x2xf32, #tpu.memory_space<vmem>>, vector<1x2xf32>
    %8 = vector.shape_cast %7 : vector<1x2xf32> to vector<1x1x2xf32>
    %9 = vector.broadcast %6 : vector<1x8x2xf32> to vector<2x8x2xf32>
    %10 = vector.broadcast %4 : vector<2x8x1xf32> to vector<2x8x2xf32>
    %11 = arith.mulf %9, %10 : vector<2x8x2xf32>
    %cst_7 = arith.constant dense<0.000000e+00> : vector<2x2xf32>
    %12 = vector.multi_reduction <add>, %11, %cst_7 [1] : vector<2x8x2xf32> to vector<2x2xf32>
    %13 = vector.shape_cast %12 : vector<2x2xf32> to vector<2x1x2xf32>
    %14 = vector.broadcast %8 : vector<1x1x2xf32> to vector<2x1x2xf32>
    %15 = arith.addf %13, %14 : vector<2x1x2xf32>
    %16 = arith.negf %15 : vector<2x1x2xf32>
    %17 = math.exp %16 : vector<2x1x2xf32>
    %cst_8 = arith.constant 1.000000e+00 : f32
    %18 = vector.broadcast %cst_8 : f32 to vector<2x1x2xf32>
    %19 = arith.addf %18, %17 : vector<2x1x2xf32>
    %20 = arith.divf %18, %19 : vector<2x1x2xf32>
    %21 = arith.mulf %15, %20 : vector<2x1x2xf32>
    %c0_9 = arith.constant 0 : index
    %c0_10 = arith.constant 0 : index
    %22 = vector.load %arg4[%c0_9, %c0_10] : memref<8x2xf32, #tpu.memory_space<vmem>>, vector<8x2xf32>
    %23 = vector.shape_cast %22 : vector<8x2xf32> to vector<1x8x2xf32>
    %c0_11 = arith.constant 0 : index
    %c0_12 = arith.constant 0 : index
    %24 = vector.load %arg5[%c0_11, %c0_12] : memref<8x1xf32, #tpu.memory_space<vmem>>, vector<8x1xf32>
    %25 = vector.shape_cast %24 : vector<8x1xf32> to vector<1x8x1xf32>
    %26 = vector.broadcast %23 : vector<1x8x2xf32> to vector<2x8x2xf32>
    %27 = vector.broadcast %21 : vector<2x1x2xf32> to vector<2x8x2xf32>
    %28 = arith.mulf %26, %27 : vector<2x8x2xf32>
    %cst_13 = arith.constant dense<0.000000e+00> : vector<2x8xf32>
    %29 = vector.multi_reduction <add>, %28, %cst_13 [2] : vector<2x8x2xf32> to vector<2x8xf32>
    %30 = vector.shape_cast %29 : vector<2x8xf32> to vector<2x8x1xf32>
    %31 = vector.broadcast %25 : vector<1x8x1xf32> to vector<2x8x1xf32>
    %32 = arith.addf %30, %31 : vector<2x8x1xf32>
    %33 = arith.negf %32 : vector<2x8x1xf32>
    %34 = math.exp %33 : vector<2x8x1xf32>
    %cst_14 = arith.constant 1.000000e+00 : f32
    %35 = vector.broadcast %cst_14 : f32 to vector<2x8x1xf32>
    %36 = arith.addf %35, %34 : vector<2x8x1xf32>
    %37 = arith.divf %35, %36 : vector<2x8x1xf32>
    %38 = vector.broadcast %37 : vector<2x8x1xf32> to vector<2x8x256xf32>
    %39 = arith.mulf %0, %38 : vector<2x8x256xf32>
    %c0_15 = arith.constant 0 : index
    %c0_16 = arith.constant 0 : index
    %c0_17 = arith.constant 0 : index
    %40 = vector.load %arg6[%c0_15, %c0_16, %c0_17] : memref<2x8x256xf32, #tpu.memory_space<vmem>>, vector<2x8x256xf32>
    tpu.vector_store %arg6[%c0_15, %c0_16, %c0_17], %39 {strides = array<i32>} : memref<2x8x256xf32, #tpu.memory_space<vmem>>, vector<2x8x256xf32>,
    return
  }
  func.func @transform_0(%arg0: i32) -> (i32, i32, i32) {
    %c0_i32 = arith.constant 0 : i32
    %c0_i32_0 = arith.constant 0 : i32
    %c0_i32_1 = arith.constant 0 : i32
    return %arg0, %c0_i32, %c0_i32_0 : i32, i32, i32
  }
  func.func @transform_1(%arg0: i32) -> (i32, i32) {
    %c0_i32 = arith.constant 0 : i32
    %c0_i32_0 = arith.constant 0 : i32
    %c0_i32_1 = arith.constant 0 : i32
    return %c0_i32, %c0_i32_0 : i32, i32
  }
  func.func @transform_2(%arg0: i32) -> (i32, i32) {
    %c0_i32 = arith.constant 0 : i32
    %c0_i32_0 = arith.constant 0 : i32
    %c0_i32_1 = arith.constant 0 : i32
    return %c0_i32, %c0_i32_0 : i32, i32
  }
  func.func @transform_3(%arg0: i32) -> (i32, i32) {
    %c0_i32 = arith.constant 0 : i32
    %c0_i32_0 = arith.constant 0 : i32
    %c0_i32_1 = arith.constant 0 : i32
    return %c0_i32, %c0_i32_0 : i32, i32
  }
  func.func @transform_4(%arg0: i32) -> (i32, i32) {
    %c0_i32 = arith.constant 0 : i32
    %c0_i32_0 = arith.constant 0 : i32
    %c0_i32_1 = arith.constant 0 : i32
    return %c0_i32, %c0_i32_0 : i32, i32
  }
  func.func @transform_5(%arg0: i32) -> (i32, i32, i32) {
    %c0_i32 = arith.constant 0 : i32
    %c0_i32_0 = arith.constant 0 : i32
    %c0_i32_1 = arith.constant 0 : i32
    return %arg0, %c0_i32, %c0_i32_0 : i32, i32, i32
  }
}

</mosaic_0001>

<llo_original>
// kernel: tpu_custom_call.1
$region0: #{tpu_custom_call.1}
  #allocation0 [shape = 'u32[]', space=smem, size = 0x4, offset = 0x4, fixed_abs, tag = 'smem constant byte address 0x4 - core index']
  #allocation1 [shape = 'u32[72,128]{1,0:T(1,128)}', space=vmem, size = 0x9000, scoped, tag = 'internal scratch']
  %s0 = inlined_call_operand.hbm [shape: f32[2,8,256], index: 0, kind: input, shape index: {}]
  %s1 = inlined_call_operand.vmem [shape: f32[8,2], index: 1, kind: input, shape index: {}]
  %s2 = inlined_call_operand.vmem [shape: f32[1,2], index: 2, kind: input, shape index: {}]
  %s3 = inlined_call_operand.vmem [shape: f32[8,2], index: 3, kind: input, shape index: {}]
  %s4 = inlined_call_operand.vmem [shape: f32[8,1], index: 4, kind: input, shape index: {}]
  %s5 = inlined_call_operand.hbm [shape: f32[2,8,256], index: 5, kind: output, shape index: {}]
  %s6 = sld [smem:[#allocation0]]
  $region34: #{tpu_custom_call.1} parent=0
    _
  %s8 = ssub.s32 1, %s6
  %s9 = scalar_select 0, %s8, %s6
  $region1: #{tpu_custom_call.1} parent=0
    #allocation2 [shape = 'u8[16384]{0}', space=vmem, size = 0x4000, scoped, tag = 'input window, operand 0, single buffered']
    #allocation3 [shape = 's32[1]{0}', space=sflag, size = 0x4, scoped, tag = 'scoped memory for tpu_custom_call.1']
    #allocation4 [shape = 's32[1]{0}', space=sflag, size = 0x4, scoped, tag = 'scoped memory for tpu_custom_call.1']
    #allocation5 [shape = 'u8[16384]{0}', space=vmem, size = 0x4000, scoped, tag = 'output window, operand 0, single buffered']
    %10 = vsyncpa [#allocation3], 0
    %11 = vsyncpa [#allocation4], 0
    // Predicated region
    $region2: #{tpu_custom_call.1} parent=1 // pred_check
      _
    $region3: #{tpu_custom_call.1} parent=1 // pred_check_branch
      %13 = sbr.rel (0) target = $region5
    $region4: #{tpu_custom_call.1} parent=1 // pred_region
      %15 = vsyncadd [#allocation3], 0
      %s16 = sshll.u32 %s0, 4
      %s17 = int_to_ptr.hbm [resolvable:$true] %s16
      %s18 = sshll.u32 [#allocation2], 4
      %s19 = int_to_ptr.vmem [resolvable:$true] %s18
      %24 = dma.hbm_to_vmem [thread:$0]  %s17, 512, %s19, [#allocation3], 256, 256, 16
    $region5: #{tpu_custom_call.1} parent=1 // pred_fallthru
      _
    // Predicated region
    $region6: #{tpu_custom_call.1} parent=1 // pred_check
      _
    $region7: #{tpu_custom_call.1} parent=1 // pred_check_branch
      %26 = sbr.rel (0) target = $region9
    $region8: #{tpu_custom_call.1} parent=1 // pred_region
      _
    $region9: #{tpu_custom_call.1} parent=1 // pred_fallthru
      _
    // Predicated region
    $region10: #{tpu_custom_call.1} parent=1 // pred_check
      _
    $region11: #{tpu_custom_call.1} parent=1 // pred_check_branch
      %28 = sbr.rel (0) target = $region13
    $region12: #{tpu_custom_call.1} parent=1 // pred_region
      _
    $region13: #{tpu_custom_call.1} parent=1 // pred_fallthru
      _
    // Predicated region
    $region14: #{tpu_custom_call.1} parent=1 // pred_check
      _
    $region15: #{tpu_custom_call.1} parent=1 // pred_check_branch
      %30 = sbr.rel (0) target = $region17
    $region16: #{tpu_custom_call.1} parent=1 // pred_region
      _
    $region17: #{tpu_custom_call.1} parent=1 // pred_fallthru
      _
    // Predicated region
    $region18: #{tpu_custom_call.1} parent=1 // pred_check
      _
    $region19: #{tpu_custom_call.1} parent=1 // pred_check_branch
      %32 = sbr.rel (0) target = $region21
    $region20: #{tpu_custom_call.1} parent=1 // pred_region
      _
    $region21: #{tpu_custom_call.1} parent=1 // pred_fallthru
      _
    // Predicated region
    $region22: #{tpu_custom_call.1} parent=1 // pred_check
      _
    $region23: #{tpu_custom_call.1} parent=1 // pred_check_branch
      %34 = sbr.rel (0) target = $region25
    $region24: #{tpu_custom_call.1} parent=1 // pred_region
      %36 = dma.done [#allocation3], 512
    $region25: #{tpu_custom_call.1} parent=1 // pred_fallthru
      _
    %v37 = vld [vmem:[#allocation2] sm:$0xff]
    %v38 = vld [vmem:[#allocation2 + $0x8] sm:$0xff]
    %v39 = vld [vmem:[#allocation2 + $0x10] sm:$0xff]
    %v40 = vld [vmem:[#allocation2 + $0x18] sm:$0xff]
    %v41 = vadd.f32 %v37, %v38
    %42 = vadd.xlane.f32.xlu0 %v41
    %v43 = vpop.xlane.xlu0 %42
    %v44 = vadd.f32 %v39, %v40
    %45 = vadd.xlane.f32.xlu0 %v44
    %v46 = vpop.xlane.xlu0 %45
    %v47 = vmul.f32 %v43, 0.00390625
    %v48 = vmul.f32 %v46, 0.00390625
    %v49 = vld [vmem:[%s1] sm:$0xff]
    %v50 = vld [vmem:[%s2] sm:$0x1]
    %v51 = vmul.f32 %v49, %v47
    %v52 = vmul.f32 %v49, %v48
    %vm53 = vcmask 15360
    %v54 = vsel %vm53, %v51, 0.0
    %v55 = vrot.slane %v54, 4
    %v56 = vadd.f32 %v54, %v55
    %v57 = vrot.slane %v56, 2
    %v58 = vadd.f32 %v56, %v57
    %v59 = vrot.slane %v58, 1
    %v60 = vadd.f32 %v58, %v59
    %v61 = vsel %vm53, %v52, 0.0
    %v62 = vrot.slane %v61, 4
    %v63 = vadd.f32 %v61, %v62
    %v64 = vrot.slane %v63, 2
    %v65 = vadd.f32 %v63, %v64
    %v66 = vrot.slane %v65, 1
    %v67 = vadd.f32 %v65, %v66
    %v68 = vadd.f32 %v60, %v50
    %v69 = vadd.f32 %v67, %v50
    %v70 = vxor.u32 %v68, 2147483648
    %v71 = vxor.u32 %v69, 2147483648
    %v72 = vmul.f32 %v70, 1.442695
    %v73 = vpow.pop %v72
    %v74 = vmul.f32 %v71, 1.442695
    %v75 = vpow.pop %v74
    %v76 = vadd.f32 %v73, 1.0
    %v77 = vadd.f32 %v75, 1.0
    %v78 = vrcp.pop %v76
    %v79 = vmul.f32 %v76, %v78
    %v80 = vsub.f32 1.0, %v79
    %v81 = vmul.f32 %v78, %v80
    %v82 = vadd.f32 %v78, %v81
    %vm83 = vweird.f32 %v76
    %vm84 = vweird.f32 %v78
    %vm85 = vmor %vm83, %vm84
    %v86 = vsel %vm85, %v78, %v82
    %v87 = vand.u32 2147483647, %v76
    %vm88 = vcmp.eq.f32.partialorder %v87, 8.507059e+37
    %v89 = vand.u32 %v76, 2147483648
    %v90 = vor.u32 1.1754944e-38, %v89
    %v91 = vsel %vm88, %v90, %v86
    %v92 = vmul.f32 1.0, %v91
    %v93 = vrcp.pop %v77
    %v94 = vmul.f32 %v77, %v93
    %v95 = vsub.f32 1.0, %v94
    %v96 = vmul.f32 %v93, %v95
    %v97 = vadd.f32 %v93, %v96
    %vm98 = vweird.f32 %v77
    %vm99 = vweird.f32 %v93
    %vm100 = vmor %vm98, %vm99
    %v101 = vsel %vm100, %v93, %v97
    %v102 = vand.u32 2147483647, %v77
    %vm103 = vcmp.eq.f32.partialorder %v102, 8.507059e+37
    %v104 = vand.u32 %v77, 2147483648
    %v105 = vor.u32 1.1754944e-38, %v104
    %v106 = vsel %vm103, %v105, %v101
    %v107 = vmul.f32 1.0, %v106
    %v108 = vmul.f32 %v68, %v92
    %v109 = vmul.f32 %v69, %v107
    %v110 = vld [vmem:[%s3] sm:$0xff]
    %v111 = vld [vmem:[%s4] sm:$0xff]
    %v112 = vperm.slane %v108, 0
    %v113 = vperm.slane %v109, 0
    %v114 = vmul.f32 %v110, %v112
    %v115 = vmul.f32 %v110, %v113
    %v116 = vsel %vm53, %v114, 0.0
    %117 = vadd.xlane.f32.xlu0 %v116
    %v118 = vpop.xlane.xlu0 %117
    %v119 = vsel %vm53, %v115, 0.0
    %120 = vadd.xlane.f32.xlu0 %v119
    %v121 = vpop.xlane.xlu0 %120
    %v122 = vadd.f32 %v118, %v111
    %v123 = vadd.f32 %v121, %v111
    %v124 = vxor.u32 %v122, 2147483648
    %v125 = vxor.u32 %v123, 2147483648
    %v126 = vmul.f32 %v124, 1.442695
    %v127 = vpow.pop %v126
    %v128 = vmul.f32 %v125, 1.442695
    %v129 = vpow.pop %v128
    %v130 = vadd.f32 %v127, 1.0
    %v131 = vadd.f32 %v129, 1.0
    %v132 = vrcp.pop %v130
    %v133 = vmul.f32 %v130, %v132
    %v134 = vsub.f32 1.0, %v133
    %v135 = vmul.f32 %v132, %v134
    %v136 = vadd.f32 %v132, %v135
    %vm137 = vweird.f32 %v130
    %vm138 = vweird.f32 %v132
    %vm139 = vmor %vm137, %vm138
    %v140 = vsel %vm139, %v132, %v136
    %v141 = vand.u32 2147483647, %v130
    %vm142 = vcmp.eq.f32.partialorder %v141, 8.507059e+37
    %v143 = vand.u32 %v130, 2147483648
    %v144 = vor.u32 1.1754944e-38, %v143
    %v145 = vsel %vm142, %v144, %v140
    %v146 = vmul.f32 1.0, %v145
    %v147 = vrcp.pop %v131
    %v148 = vmul.f32 %v131, %v147
    %v149 = vsub.f32 1.0, %v148
    %v150 = vmul.f32 %v147, %v149
    %v151 = vadd.f32 %v147, %v150
    %vm152 = vweird.f32 %v131
    %vm153 = vweird.f32 %v147
    %vm154 = vmor %vm152, %vm153
    %v155 = vsel %vm154, %v147, %v151
    %v156 = vand.u32 2147483647, %v131
    %vm157 = vcmp.eq.f32.partialorder %v156, 8.507059e+37
    %v158 = vand.u32 %v131, 2147483648
    %v159 = vor.u32 1.1754944e-38, %v158
    %v160 = vsel %vm157, %v159, %v155
    %v161 = vmul.f32 1.0, %v160
    %163 = vset.pattern.permute.xlu0 0
    %164 = vperm.xlu0 %163, %v146
    %v165 = vpop.permute.xlu0 %164
    %168 = vset.pattern.permute.xlu0 0
    %169 = vperm.xlu0 %168, %v161
    %v170 = vpop.permute.xlu0 %169
    %v172 = vmul.f32 %v37, %v165
    %v173 = vmul.f32 %v38, %v165
    %v174 = vmul.f32 %v39, %v170
    %v175 = vmul.f32 %v40, %v170
    %176 = vst [vmem:[#allocation5] sm:$0xff] %v172
    %177 = vst [vmem:[#allocation5 + $0x8] sm:$0xff] %v173
    %178 = vst [vmem:[#allocation5 + $0x10] sm:$0xff] %v174
    %179 = vst [vmem:[#allocation5 + $0x18] sm:$0xff] %v175
    // Predicated region
    $region26: #{tpu_custom_call.1} parent=1 // pred_check
      _
    $region27: #{tpu_custom_call.1} parent=1 // pred_check_branch
      %181 = sbr.rel (0) target = $region29
    $region28: #{tpu_custom_call.1} parent=1 // pred_region
      %183 = vsyncadd [#allocation4], 0
      %s184 = sshll.u32 [#allocation5], 4
      %s185 = int_to_ptr.vmem [resolvable:$true] %s184
      %s186 = sshll.u32 %s5, 4
      %s187 = int_to_ptr.hbm [resolvable:$true] %s186
      %192 = dma.vmem_to_hbm [thread:$0]  %s185, 512, %s187, [#allocation4], 256, 256, 16
    $region29: #{tpu_custom_call.1} parent=1 // pred_fallthru
      _
    // Predicated region
    $region30: #{tpu_custom_call.1} parent=1 // pred_check
      _
    $region31: #{tpu_custom_call.1} parent=1 // pred_check_branch
      %194 = sbr.rel (0) target = $region33
    $region32: #{tpu_custom_call.1} parent=1 // pred_region
      %196 = dma.done [#allocation4], 512
    $region33: #{tpu_custom_call.1} parent=1 // pred_fallthru
      _
    %197 = vsyncpa [#allocation3], 1
    %198 = vsyncpa [#allocation4], 1

</llo_original>
